<compile_context>
chip_gen: v7x
topology: tpu7x:2x2x1
jax: 0.10.0
libtpu: 0.0.40
codegen_flags: <defaults>
</compile_context>

<pallas_src>
import jax
import jax.numpy as jnp
from jax import lax
from jax.experimental import pallas as pl
from jax.experimental.pallas import tpu as pltpu


def _active_unit_kernel(item_ref, node_ref,
                        w0a_ref, w0b_ref, w0c_ref, b0_ref,
                        w1_ref, b1_ref,
                        slopes_ref,
                        out_ref):
    """One batch tile of the ActiveUnit forward (batch on lanes).

    item_ref, node_ref : (TB, E)   VMEM, streamed per grid step
    w0a/b/c_ref        : (H1, E)   VMEM, resident (torch-layout slices of W0)
    b0_ref             : (H1, 1)   VMEM, resident
    w1_ref             : (1, H1)   VMEM, resident (torch layout)
    b1_ref             : (1, 1)    VMEM, resident
    slopes_ref         : (2,)      SMEM (PReLU slopes for layer 0 / layer 1)
    out_ref            : (1, TB)   VMEM, lane-dense
    """
    item = item_ref[...]
    node = node_ref[...]
    cross = item * node

    # Layer 0, transposed: h = W0 @ x^T computed as three accumulating K=E
    # matmuls (no concat, no (TB, 3E) temporary).  Result (H1, TB): batch on lanes.
    dims = (((1,), (1,)), ((), ()))   # contract the E axis of both operands
    h = lax.dot_general(w0a_ref[...], item, dims,
                        preferred_element_type=jnp.float32)
    h = h + lax.dot_general(w0b_ref[...], cross, dims,
                            preferred_element_type=jnp.float32)
    h = h + lax.dot_general(w0c_ref[...], node, dims,
                            preferred_element_type=jnp.float32)
    h = h + b0_ref[...]
    a0 = slopes_ref[0]
    h = jnp.where(h > 0, h, a0 * h)                                # PReLU

    # Layer 1: (1, H1) @ (H1, TB) -> (1, TB)  (lane-dense output block)
    y = jnp.dot(w1_ref[...], h, preferred_element_type=jnp.float32) + b1_ref[...]
    a1 = slopes_ref[1]
    out_ref[...] = jnp.where(y > 0, y, a1 * y)                     # PReLU


def _auto_block(B, E):
    """Pick the batch tile: lane-dense (mult. of 128), VMEM-safe, megacore-friendly."""
    # Double-buffered item+node stream = 2 arrays * 2 buffers * TB * E * 4 B.
    # Keep it under ~8 MiB so it fits default scoped VMEM on v5e(16)/v6e(32)/v7x(32 MiB).
    tb = (8 * 1024 * 1024) // (16 * E)
    tb = min(2048, tb)                        # 512-2048 rows already ~85% of HBM roofline
    tb = min(tb, pl.cdiv(B, 128) * 128)       # don't exceed the (lane-padded) batch
    tb = max(128, (tb // 128) * 128)          # multiple of 128 for lane-dense output
    # Give v7x's two TensorCores at least two grid steps when the batch allows.
    while tb > 128 and pl.cdiv(B, tb) < 2:
        tb = max(128, ((tb // 2) // 128) * 128)
    return tb


def active_unit_forward(item, node, params, *, block_b=None, vmem_limit_bytes=None):
    """item, node: (B, E) float32.  Returns (B, 1) float32."""
    B, E = item.shape
    w0, b0, w1, b1, slopes = params           # torch layouts
    H1 = w0.shape[0]
    assert w0.shape == (H1, 3 * E) and b0.shape == (H1,)
    assert w1.shape == (1, H1) and b1.shape == (1,)   # module default H2 == 1

    TB = _auto_block(B, E) if block_b is None else block_b
    num_tiles = pl.cdiv(B, TB)
    B_pad = num_tiles * TB

    # Pre-slice W0 (torch (H1, 3E)) into the three K=E operands; column-vector bias.
    w0a, w0b, w0c = w0[:, :E], w0[:, E:2 * E], w0[:, 2 * E:]
    b0c = b0.reshape(H1, 1)
    b1m = b1.reshape(1, 1)

    row_spec = pl.BlockSpec((TB, E), lambda i: (i, 0))              # streamed inputs
    const2d = lambda shape: pl.BlockSpec(shape, lambda i: (0, 0))   # resident weights
    smem_spec = pl.BlockSpec(memory_space=pltpu.MemorySpace.SMEM)

    out = pl.pallas_call(
        _active_unit_kernel,
        out_shape=jax.ShapeDtypeStruct((1, B_pad), jnp.float32),
        grid=(num_tiles,),
        in_specs=[
            row_spec,                   # item   (pipelined)
            row_spec,                   # node   (pipelined)
            const2d((H1, E)),           # W0[:, :E]
            const2d((H1, E)),           # W0[:, E:2E]
            const2d((H1, E)),           # W0[:, 2E:]
            const2d((H1, 1)),           # b0
            const2d((1, H1)),           # w1
            const2d((1, 1)),            # b1
            smem_spec,                  # PReLU slopes (SMEM)
        ],
        out_specs=pl.BlockSpec((1, TB), lambda i: (0, i)),          # lane-dense output
        compiler_params=pltpu.CompilerParams(
            dimension_semantics=("parallel",),   # shard batch tiles on v7x's 2 TCs
            vmem_limit_bytes=vmem_limit_bytes),
    )(item, node, w0a, w0b, w0c, b0c, w1, b1m, slopes)

    # Lane-dense (1, B_pad) slab -> (B, 1); padding lanes (if any) are dropped.
    return out.reshape(B_pad, 1)[:B]


def init_params(key, emb_dim, hidden=36):
    """Re-creates the PyTorch init in torch layouts: W ~ N(0,1)/sqrt(in), b = 0.1, PReLU 0.25."""
    key0, key1 = jax.random.split(key)
    w0 = jax.random.normal(key0, (hidden, 3 * emb_dim), jnp.float32) / jnp.sqrt(
        jnp.float32(3 * emb_dim))
    b0 = jnp.full((hidden,), 0.1, jnp.float32)
    w1 = jax.random.normal(key1, (1, hidden), jnp.float32) / jnp.sqrt(
        jnp.float32(hidden))
    b1 = jnp.full((1,), 0.1, jnp.float32)
    slopes = jnp.full((2,), 0.25, jnp.float32)   # PReLU slopes (layer 0, layer 1)
    return (w0, b0, w1, b1, slopes)


def active_unit_reference(item, node, params):
    """Pure-JAX reference mirroring the PyTorch forward."""
    w0, b0, w1, b1, slopes = params
    x = jnp.concatenate([item, item * node, node], axis=-1)
    h = x @ w0.T + b0
    h = jnp.where(h > 0, h, slopes[0] * h)
    y = h @ w1.T + b1
    return jnp.where(y > 0, y, slopes[1] * y)


if __name__ == "__main__":
    key = jax.random.PRNGKey(0)
    B, E = 256, 16   # small demo: auto TB=128 -> 2 grid steps (pipelining + both TCs)

    k_item, k_node, k_params = jax.random.split(key, 3)
    item = jax.random.normal(k_item, (B, E), dtype=jnp.float32)
    node = jax.random.normal(k_node, (B, E), dtype=jnp.float32)
    params = init_params(k_params, E)

    fwd = jax.jit(active_unit_forward)
    out = jax.block_until_ready(fwd(item, node, params))

    ref = active_unit_reference(item, node, params)
    assert out.shape == (B, 1), out.shape
    assert jnp.allclose(out, ref, atol=1e-4, rtol=1e-4), float(
        jnp.max(jnp.abs(out - ref)))

    print("KERNEL_OK")
</pallas_src>

<mosaic_0001>
module attributes {stable_mosaic.version = 11 : i64} {
  func.func @_active_unit_kernel(%arg0: i32, %arg1: memref<128x16xf32, #tpu.memory_space<vmem>>, %arg2: memref<128x16xf32, #tpu.memory_space<vmem>>, %arg3: memref<36x16xf32, #tpu.memory_space<vmem>>, %arg4: memref<36x16xf32, #tpu.memory_space<vmem>>, %arg5: memref<36x16xf32, #tpu.memory_space<vmem>>, %arg6: memref<36x1xf32, #tpu.memory_space<vmem>>, %arg7: memref<1x36xf32, #tpu.memory_space<vmem>>, %arg8: memref<1x1xf32, #tpu.memory_space<vmem>>, %arg9: memref<2xf32, #tpu.memory_space<smem>>, %arg10: memref<1x128xf32, #tpu.memory_space<vmem>>) attributes {dimension_semantics = [#tpu.dimension_semantics<parallel>], iteration_bounds = array<i64: 2>, scalar_prefetch = 0 : i64, scratch_operands = 0 : i64, tpu.core_type = #tpu.core_type<tc>, window_params = [{transform_indices = @transform_0, window_bounds = array<i64: 128, 16>}, {transform_indices = @transform_1, window_bounds = array<i64: 128, 16>}, {pipeline_mode = #tpu.pipeline_mode<synchronous>, transform_indices = @transform_2, window_bounds = array<i64: 36, 16>}, {pipeline_mode = #tpu.pipeline_mode<synchronous>, transform_indices = @transform_3, window_bounds = array<i64: 36, 16>}, {pipeline_mode = #tpu.pipeline_mode<synchronous>, transform_indices = @transform_4, window_bounds = array<i64: 36, 16>}, {pipeline_mode = #tpu.pipeline_mode<synchronous>, transform_indices = @transform_5, window_bounds = array<i64: 36, 1>}, {pipeline_mode = #tpu.pipeline_mode<synchronous>, transform_indices = @transform_6, window_bounds = array<i64: 1, 36>}, {pipeline_mode = #tpu.pipeline_mode<synchronous>, transform_indices = @transform_7, window_bounds = array<i64: 1, 1>}, {transform_indices = @transform_8, window_bounds = array<i64: 2>}, {transform_indices = @transform_9, window_bounds = array<i64: 1, 128>}]} {
    %c0 = arith.constant 0 : index
    %c0_0 = arith.constant 0 : index
    %0 = vector.load %arg1[%c0, %c0_0] : memref<128x16xf32, #tpu.memory_space<vmem>>, vector<128x16xf32>
    %c0_1 = arith.constant 0 : index
    %c0_2 = arith.constant 0 : index
    %1 = vector.load %arg2[%c0_1, %c0_2] : memref<128x16xf32, #tpu.memory_space<vmem>>, vector<128x16xf32>
    %2 = arith.mulf %0, %1 : vector<128x16xf32>
    %c0_3 = arith.constant 0 : index
    %c0_4 = arith.constant 0 : index
    %3 = vector.load %arg3[%c0_3, %c0_4] : memref<36x16xf32, #tpu.memory_space<vmem>>, vector<36x16xf32>
    %cst = arith.constant dense<0.000000e+00> : vector<36x128xf32>
    %4 = tpu.matmul %3, %0, %cst {dimension_numbers = #tpu.dot_dimension_numbers<[1], [1], [0], [0], [0, 0, 1, 0], [], []>} : vector<36x16xf32>, vector<128x16xf32>, vector<36x128xf32> -> vector<36x128xf32>
    %c0_5 = arith.constant 0 : index
    %c0_6 = arith.constant 0 : index
    %5 = vector.load %arg4[%c0_5, %c0_6] : memref<36x16xf32, #tpu.memory_space<vmem>>, vector<36x16xf32>
    %cst_7 = arith.constant dense<0.000000e+00> : vector<36x128xf32>
    %6 = tpu.matmul %5, %2, %cst_7 {dimension_numbers = #tpu.dot_dimension_numbers<[1], [1], [0], [0], [0, 0, 1, 0], [], []>} : vector<36x16xf32>, vector<128x16xf32>, vector<36x128xf32> -> vector<36x128xf32>
    %7 = arith.addf %4, %6 : vector<36x128xf32>
    %c0_8 = arith.constant 0 : index
    %c0_9 = arith.constant 0 : index
    %8 = vector.load %arg5[%c0_8, %c0_9] : memref<36x16xf32, #tpu.memory_space<vmem>>, vector<36x16xf32>
    %cst_10 = arith.constant dense<0.000000e+00> : vector<36x128xf32>
    %9 = tpu.matmul %8, %1, %cst_10 {dimension_numbers = #tpu.dot_dimension_numbers<[1], [1], [0], [0], [0, 0, 1, 0], [], []>} : vector<36x16xf32>, vector<128x16xf32>, vector<36x128xf32> -> vector<36x128xf32>
    %10 = arith.addf %7, %9 : vector<36x128xf32>
    %c0_11 = arith.constant 0 : index
    %c0_12 = arith.constant 0 : index
    %11 = vector.load %arg6[%c0_11, %c0_12] : memref<36x1xf32, #tpu.memory_space<vmem>>, vector<36x1xf32>
    %12 = vector.broadcast %11 : vector<36x1xf32> to vector<36x128xf32>
    %13 = arith.addf %10, %12 : vector<36x128xf32>
    %c0_13 = arith.constant 0 : index
    %14 = memref.load %arg9[%c0_13] : memref<2xf32, #tpu.memory_space<smem>>
    %cst_14 = arith.constant 0.000000e+00 : f32
    %15 = vector.broadcast %cst_14 : f32 to vector<36x128xf32>
    %16 = arith.cmpf ogt, %13, %15 : vector<36x128xf32>
    %17 = vector.broadcast %14 : f32 to vector<36x128xf32>
    %18 = arith.mulf %17, %13 : vector<36x128xf32>
    %19 = arith.select %16, %13, %18 : vector<36x128xi1>, vector<36x128xf32>
    %c0_15 = arith.constant 0 : index
    %c0_16 = arith.constant 0 : index
    %20 = vector.load %arg7[%c0_15, %c0_16] : memref<1x36xf32, #tpu.memory_space<vmem>>, vector<1x36xf32>
    %cst_17 = arith.constant dense<0.000000e+00> : vector<1x128xf32>
    %21 = tpu.matmul %20, %19, %cst_17 {dimension_numbers = #tpu.dot_dimension_numbers<[1], [0], [0], [1], [0, 0, 1, 1], [], []>} : vector<1x36xf32>, vector<36x128xf32>, vector<1x128xf32> -> vector<1x128xf32>
    %c0_18 = arith.constant 0 : index
    %c0_19 = arith.constant 0 : index
    %22 = vector.load %arg8[%c0_18, %c0_19] : memref<1x1xf32, #tpu.memory_space<vmem>>, vector<1x1xf32>
    %23 = vector.broadcast %22 : vector<1x1xf32> to vector<1x128xf32>
    %24 = arith.addf %21, %23 : vector<1x128xf32>
    %c1 = arith.constant 1 : index
    %25 = memref.load %arg9[%c1] : memref<2xf32, #tpu.memory_space<smem>>
    %cst_20 = arith.constant 0.000000e+00 : f32
    %26 = vector.broadcast %cst_20 : f32 to vector<1x128xf32>
    %27 = arith.cmpf ogt, %24, %26 : vector<1x128xf32>
    %28 = vector.broadcast %25 : f32 to vector<1x128xf32>
    %29 = arith.mulf %28, %24 : vector<1x128xf32>
    %30 = arith.select %27, %24, %29 : vector<1x128xi1>, vector<1x128xf32>
    %c0_21 = arith.constant 0 : index
    %c0_22 = arith.constant 0 : index
    %31 = vector.load %arg10[%c0_21, %c0_22] : memref<1x128xf32, #tpu.memory_space<vmem>>, vector<1x128xf32>
    tpu.vector_store %arg10[%c0_21, %c0_22], %30 {strides = array<i32>} : memref<1x128xf32, #tpu.memory_space<vmem>>, vector<1x128xf32>,
    return
  }
  func.func @transform_0(%arg0: i32) -> (i32, i32) {
    %c0_i32 = arith.constant 0 : i32
    %c0_i32_0 = arith.constant 0 : i32
    return %arg0, %c0_i32 : i32, i32
  }
  func.func @transform_1(%arg0: i32) -> (i32, i32) {
    %c0_i32 = arith.constant 0 : i32
    %c0_i32_0 = arith.constant 0 : i32
    return %arg0, %c0_i32 : i32, i32
  }
  func.func @transform_2(%arg0: i32) -> (i32, i32) {
    %c0_i32 = arith.constant 0 : i32
    %c0_i32_0 = arith.constant 0 : i32
    %c0_i32_1 = arith.constant 0 : i32
    return %c0_i32, %c0_i32_0 : i32, i32
  }
  func.func @transform_3(%arg0: i32) -> (i32, i32) {
    %c0_i32 = arith.constant 0 : i32
    %c0_i32_0 = arith.constant 0 : i32
    %c0_i32_1 = arith.constant 0 : i32
    return %c0_i32, %c0_i32_0 : i32, i32
  }
  func.func @transform_4(%arg0: i32) -> (i32, i32) {
    %c0_i32 = arith.constant 0 : i32
    %c0_i32_0 = arith.constant 0 : i32
    %c0_i32_1 = arith.constant 0 : i32
    return %c0_i32, %c0_i32_0 : i32, i32
  }
  func.func @transform_5(%arg0: i32) -> (i32, i32) {
    %c0_i32 = arith.constant 0 : i32
    %c0_i32_0 = arith.constant 0 : i32
    %c0_i32_1 = arith.constant 0 : i32
    return %c0_i32, %c0_i32_0 : i32, i32
  }
  func.func @transform_6(%arg0: i32) -> (i32, i32) {
    %c0_i32 = arith.constant 0 : i32
    %c0_i32_0 = arith.constant 0 : i32
    %c0_i32_1 = arith.constant 0 : i32
    return %c0_i32, %c0_i32_0 : i32, i32
  }
  func.func @transform_7(%arg0: i32) -> (i32, i32) {
    %c0_i32 = arith.constant 0 : i32
    %c0_i32_0 = arith.constant 0 : i32
    %c0_i32_1 = arith.constant 0 : i32
    return %c0_i32, %c0_i32_0 : i32, i32
  }
  func.func @transform_8(%arg0: i32) -> i32 {
    %c0_i32 = arith.constant 0 : i32
    %c0_i32_0 = arith.constant 0 : i32
    return %c0_i32 : i32
  }
  func.func @transform_9(%arg0: i32) -> (i32, i32) {
    %c0_i32 = arith.constant 0 : i32
    %c0_i32_0 = arith.constant 0 : i32
    return %c0_i32, %arg0 : i32, i32
  }
}

</mosaic_0001>

<llo_original>
// kernel: active_unit_forward.1
$region0: #{active_unit_forward.1}
  #allocation0 [shape = 'u32[]', space=smem, size = 0x4, offset = 0x4, fixed_abs, tag = 'smem constant byte address 0x4 - core index']
  #allocation1 [shape = 'u32[144,128]{1,0:T(1,128)}', space=vmem, size = 0x12000, scoped, tag = 'internal scratch']
  #allocation2 [shape = 'f32[1,1]{1,0:T(1,128)S(1)}', space=vmem, size = 0x200, scoped, tag = 'scoped memory for active_unit_forward.1']
  %s0 = inlined_call_operand.vmem [shape: f32[256,16], index: 0, kind: input, shape index: {}]
  %s1 = inlined_call_operand.vmem [shape: f32[256,16], index: 1, kind: input, shape index: {}]
  %s2 = inlined_call_operand.vmem [shape: f32[36,16], index: 2, kind: input, shape index: {}]
  %s3 = inlined_call_operand.vmem [shape: f32[36,16], index: 3, kind: input, shape index: {}]
  %s4 = inlined_call_operand.vmem [shape: f32[36,16], index: 4, kind: input, shape index: {}]
  %s5 = inlined_call_operand.vmem [shape: f32[36,1], index: 5, kind: input, shape index: {}]
  %s6 = inlined_call_operand.vmem [shape: f32[1,36], index: 6, kind: input, shape index: {}]
  %s7 = inlined_call_operand.<no memory space> [shape: f32[1,1], index: 7, kind: input, shape index: {}]
  %s8 = inlined_call_operand.vmem [shape: f32[2], index: 8, kind: input, shape index: {}]
  %s9 = inlined_call_operand.hbm [shape: f32[1,256], index: 9, kind: output, shape index: {}]
  %s10 = sld [smem:[#allocation0]]
  $region73: #{active_unit_forward.1} parent=0
    _
  %s12 = ssub.s32 1, %s10
  %s13 = scalar_select 0, %s12, %s10
  %v14 = vstv %s7
  %15 = vst [vmem:[#allocation2] sm:$0x1] %v14
  $region1: #{active_unit_forward.1} parent=0
    #allocation3 [shape = 'u8[512]{0}', space=smem, size = 0x200, scoped, tag = 'input window, operand 8, single buffered']
    #allocation4 [shape = 's32[2]{0}', space=sflag, size = 0x8, scoped, tag = 'scoped memory for active_unit_forward.1']
    #allocation5 [shape = 's32[2]{0}', space=sflag, size = 0x8, scoped, tag = 'scoped memory for active_unit_forward.1']
    #allocation6 [shape = 'u8[1024]{0}', space=vmem, size = 0x400, scoped, tag = 'output window, operand 0']
    %16 = vsyncpa [#allocation5], 0
    %17 = vsyncpa [#allocation4], 0
    %s18 = scalar_lea.sflag [#allocation4], 1
    %19 = vsyncpa %s18, 0
    loop: start=0, step=1, limit=4
    $region2: #{active_unit_forward.1} parent=1 // loop_pre_header
      _
    $region3: #{active_unit_forward.1} parent=1 // loop_header
      %s21 = sphi 0, %s25
      %p22 = scmp.ge.s32.totalorder %s21, 4
      %s31 = sphi 0, %s33
      %s34 = sphi 0, %s31
      %s35 = sphi 0, %s34
      %s51 = sphi 0, %s35
      %s57 = sphi 0, %s59
      %s60 = sphi 0, %s57
      %s61 = sphi 0, %s60
      %s77 = sphi 0, %s61
      %s81 = sphi 0, %s81
      %s83 = sphi 0, %s81
      %s84 = sphi 0, %s83
      %s98 = sphi 0, %s84
      %s102 = sphi 0, %s102
      %s104 = sphi 0, %s102
      %s105 = sphi 0, %s104
      %s119 = sphi 0, %s105
      %s123 = sphi 0, %s123
      %s125 = sphi 0, %s123
      %s126 = sphi 0, %s125
      %s140 = sphi 0, %s126
      %s144 = sphi 0, %s144
      %s146 = sphi 0, %s144
      %s147 = sphi 0, %s146
      %s161 = sphi 0, %s147
      %s165 = sphi 0, %s165
      %s167 = sphi 0, %s165
      %s168 = sphi 0, %s167
      %s182 = sphi 0, %s168
      %s186 = sphi 0, %s186
      %s188 = sphi 0, %s186
      %s189 = sphi 0, %s188
      %s203 = sphi 0, %s189
      %s207 = sphi 0, %s207
      %s209 = sphi 0, %s207
      %s210 = sphi 0, %s209
      %s224 = sphi 0, %s210
      %s230 = sphi 0, %s232
      %s233 = sphi 0, %s230
      %s234 = sphi 0, %s233
      %s250 = sphi 0, %s234
    $region4: #{active_unit_forward.1} parent=1 // loop_header_branch
      %24 = sbr.rel (%p22) target = $region8
    $region5: #{active_unit_forward.1} parent=1 // loop_body
      %s26 = ssub.s32 %s21, 1
      %s27 = ssub.s32 %s21, 2
      %s28 = sadd.s32 %s21, 1
      %s29 = ssub.s32 %s21, %s28
      %p30 = scmp.eq.s32.totalorder %s29, 0
      %s32 = sadd.s32 %s31, 1
      %s33 = scalar_select %p30, %s31, %s32
      %p36 = pneg %p30
      %p37 = scmp.eq.s32.totalorder %s21, 1
      %p38 = por %p36, %p37
      %p39 = scmp.ne.s32.totalorder %s31, %s34
      %p40 = scmp.eq.s32.totalorder %s21, 0
      %p41 = por %p39, %p40
      %p42 = scmp.ne.s32.totalorder %s31, %s34
      %p43 = scmp.eq.s32.totalorder %s26, 1
      %p44 = por %p42, %p43
      %p45 = scmp.ne.s32.totalorder %s34, %s35
      %p46 = scmp.eq.s32.totalorder %s26, 0
      %p47 = por %p45, %p46
      %p48 = scmp.ne.s32.totalorder %s34, %s35
      %p49 = scmp.eq.s32.totalorder %s27, 1
      %p50 = por %p48, %p49
      %p52 = scmp.ne.s32.totalorder %s35, %s51
      %p53 = scmp.eq.s32.totalorder %s27, 0
      %p54 = por %p52, %p53
      %s55 = ssub.s32 %s21, %s28
      %p56 = scmp.eq.s32.totalorder %s55, 0
      %s58 = sadd.s32 %s57, 1
      %s59 = scalar_select %p56, %s57, %s58
      %p62 = pneg %p56
      %p63 = scmp.eq.s32.totalorder %s21, 1
      %p64 = por %p62, %p63
      %p65 = scmp.ne.s32.totalorder %s57, %s60
      %p66 = scmp.eq.s32.totalorder %s21, 0
      %p67 = por %p65, %p66
      %p68 = scmp.ne.s32.totalorder %s57, %s60
      %p69 = scmp.eq.s32.totalorder %s26, 1
      %p70 = por %p68, %p69
      %p71 = scmp.ne.s32.totalorder %s60, %s61
      %p72 = scmp.eq.s32.totalorder %s26, 0
      %p73 = por %p71, %p72
      %p74 = scmp.ne.s32.totalorder %s60, %s61
      %p75 = scmp.eq.s32.totalorder %s27, 1
      %p76 = por %p74, %p75
      %p78 = scmp.ne.s32.totalorder %s61, %s77
      %p79 = scmp.eq.s32.totalorder %s27, 0
      %p80 = por %p78, %p79
      %s82 = sadd.s32 %s81, 1
      %p85 = scmp.eq.s32.totalorder %s21, 1
      %p86 = scmp.ne.s32.totalorder %s81, %s83
      %p87 = scmp.eq.s32.totalorder %s21, 0
      %p88 = por %p86, %p87
      %p89 = scmp.ne.s32.totalorder %s81, %s83
      %p90 = scmp.eq.s32.totalorder %s26, 1
      %p91 = por %p89, %p90
      %p92 = scmp.ne.s32.totalorder %s83, %s84
      %p93 = scmp.eq.s32.totalorder %s26, 0
      %p94 = por %p92, %p93
      %p95 = scmp.ne.s32.totalorder %s83, %s84
      %p96 = scmp.eq.s32.totalorder %s27, 1
      %p97 = por %p95, %p96
      %p99 = scmp.ne.s32.totalorder %s84, %s98
      %p100 = scmp.eq.s32.totalorder %s27, 0
      %p101 = por %p99, %p100
      %s103 = sadd.s32 %s102, 1
      %p106 = scmp.eq.s32.totalorder %s21, 1
      %p107 = scmp.ne.s32.totalorder %s102, %s104
      %p108 = scmp.eq.s32.totalorder %s21, 0
      %p109 = por %p107, %p108
      %p110 = scmp.ne.s32.totalorder %s102, %s104
      %p111 = scmp.eq.s32.totalorder %s26, 1
      %p112 = por %p110, %p111
      %p113 = scmp.ne.s32.totalorder %s104, %s105
      %p114 = scmp.eq.s32.totalorder %s26, 0
      %p115 = por %p113, %p114
      %p116 = scmp.ne.s32.totalorder %s104, %s105
      %p117 = scmp.eq.s32.totalorder %s27, 1
      %p118 = por %p116, %p117
      %p120 = scmp.ne.s32.totalorder %s105, %s119
      %p121 = scmp.eq.s32.totalorder %s27, 0
      %p122 = por %p120, %p121
      %s124 = sadd.s32 %s123, 1
      %p127 = scmp.eq.s32.totalorder %s21, 1
      %p128 = scmp.ne.s32.totalorder %s123, %s125
      %p129 = scmp.eq.s32.totalorder %s21, 0
      %p130 = por %p128, %p129
      %p131 = scmp.ne.s32.totalorder %s123, %s125
      %p132 = scmp.eq.s32.totalorder %s26, 1
      %p133 = por %p131, %p132
      %p134 = scmp.ne.s32.totalorder %s125, %s126
      %p135 = scmp.eq.s32.totalorder %s26, 0
      %p136 = por %p134, %p135
      %p137 = scmp.ne.s32.totalorder %s125, %s126
      %p138 = scmp.eq.s32.totalorder %s27, 1
      %p139 = por %p137, %p138
      %p141 = scmp.ne.s32.totalorder %s126, %s140
      %p142 = scmp.eq.s32.totalorder %s27, 0
      %p143 = por %p141, %p142
      %s145 = sadd.s32 %s144, 1
      %p148 = scmp.eq.s32.totalorder %s21, 1
      %p149 = scmp.ne.s32.totalorder %s144, %s146
      %p150 = scmp.eq.s32.totalorder %s21, 0
      %p151 = por %p149, %p150
      %p152 = scmp.ne.s32.totalorder %s144, %s146
      %p153 = scmp.eq.s32.totalorder %s26, 1
      %p154 = por %p152, %p153
      %p155 = scmp.ne.s32.totalorder %s146, %s147
      %p156 = scmp.eq.s32.totalorder %s26, 0
      %p157 = por %p155, %p156
      %p158 = scmp.ne.s32.totalorder %s146, %s147
      %p159 = scmp.eq.s32.totalorder %s27, 1
      %p160 = por %p158, %p159
      %p162 = scmp.ne.s32.totalorder %s147, %s161
      %p163 = scmp.eq.s32.totalorder %s27, 0
      %p164 = por %p162, %p163
      %s166 = sadd.s32 %s165, 1
      %p169 = scmp.eq.s32.totalorder %s21, 1
      %p170 = scmp.ne.s32.totalorder %s165, %s167
      %p171 = scmp.eq.s32.totalorder %s21, 0
      %p172 = por %p170, %p171
      %p173 = scmp.ne.s32.totalorder %s165, %s167
      %p174 = scmp.eq.s32.totalorder %s26, 1
      %p175 = por %p173, %p174
      %p176 = scmp.ne.s32.totalorder %s167, %s168
      %p177 = scmp.eq.s32.totalorder %s26, 0
      %p178 = por %p176, %p177
      %p179 = scmp.ne.s32.totalorder %s167, %s168
      %p180 = scmp.eq.s32.totalorder %s27, 1
      %p181 = por %p179, %p180
      %p183 = scmp.ne.s32.totalorder %s168, %s182
      %p184 = scmp.eq.s32.totalorder %s27, 0
      %p185 = por %p183, %p184
      %s187 = sadd.s32 %s186, 1
      %p190 = scmp.eq.s32.totalorder %s21, 1
      %p191 = scmp.ne.s32.totalorder %s186, %s188
      %p192 = scmp.eq.s32.totalorder %s21, 0
      %p193 = por %p191, %p192
      %p194 = scmp.ne.s32.totalorder %s186, %s188
      %p195 = scmp.eq.s32.totalorder %s26, 1
      %p196 = por %p194, %p195
      %p197 = scmp.ne.s32.totalorder %s188, %s189
      %p198 = scmp.eq.s32.totalorder %s26, 0
      %p199 = por %p197, %p198
      %p200 = scmp.ne.s32.totalorder %s188, %s189
      %p201 = scmp.eq.s32.totalorder %s27, 1
      %p202 = por %p200, %p201
      %p204 = scmp.ne.s32.totalorder %s189, %s203
      %p205 = scmp.eq.s32.totalorder %s27, 0
      %p206 = por %p204, %p205
      %s208 = sadd.s32 %s207, 1
      %p211 = scmp.eq.s32.totalorder %s21, 1
      %p212 = scmp.ne.s32.totalorder %s207, %s209
      %p213 = scmp.eq.s32.totalorder %s21, 0
      %p214 = por %p212, %p213
      %p215 = scmp.ne.s32.totalorder %s207, %s209
      %p216 = scmp.eq.s32.totalorder %s26, 1
      %p217 = por %p215, %p216
      %p218 = scmp.ne.s32.totalorder %s209, %s210
      %p219 = scmp.eq.s32.totalorder %s26, 0
      %p220 = por %p218, %p219
      %p221 = scmp.ne.s32.totalorder %s209, %s210
      %p222 = scmp.eq.s32.totalorder %s27, 1
      %p223 = por %p221, %p222
      %p225 = scmp.ne.s32.totalorder %s210, %s224
      %p226 = scmp.eq.s32.totalorder %s27, 0
      %p227 = por %p225, %p226
      %s228 = ssub.s32 %s21, %s28
      %p229 = scmp.eq.s32.totalorder %s228, 0
      %s231 = sadd.s32 %s230, 1
      %s232 = scalar_select %p229, %s230, %s231
      %p235 = pneg %p229
      %p236 = scmp.eq.s32.totalorder %s21, 1
      %p237 = por %p235, %p236
      %p238 = scmp.ne.s32.totalorder %s230, %s233
      %p239 = scmp.eq.s32.totalorder %s21, 0
      %p240 = por %p238, %p239
      %p241 = scmp.ne.s32.totalorder %s230, %s233
      %p242 = scmp.eq.s32.totalorder %s26, 1
      %p243 = por %p241, %p242
      %p244 = scmp.ne.s32.totalorder %s233, %s234
      %p245 = scmp.eq.s32.totalorder %s26, 0
      %p246 = por %p244, %p245
      %p247 = scmp.ne.s32.totalorder %s233, %s234
      %p248 = scmp.eq.s32.totalorder %s27, 1
      %p249 = por %p247, %p248
      %p251 = scmp.ne.s32.totalorder %s234, %s250
      %p252 = scmp.eq.s32.totalorder %s27, 0
      %p253 = por %p251, %p252
      %p254 = scmp.le.s32.totalorder 1, %s21
      %p255 = scmp.lt.s32.totalorder %s21, 3
      %p256 = pnand %p254, %p255
      %p257 = pneg %p256
      // Predicated region
      $region9: #{active_unit_forward.1} parent=5 // pred_check
        _
      $region10: #{active_unit_forward.1} parent=5 // pred_check_branch
        %259 = sbr.rel (%p256) target = $region12
      $region11: #{active_unit_forward.1} parent=5 // pred_region
        %s260 = ssub.s32 %s21, 1
        // Predicated region
        $region13: #{active_unit_forward.1} parent=11 // pred_check
          %p261 = pneg %p94
        $region14: #{active_unit_forward.1} parent=11 // pred_check_branch
          %263 = sbr.rel (%p261) target = $region16
        $region15: #{active_unit_forward.1} parent=11 // pred_region
          _
        $region16: #{active_unit_forward.1} parent=11 // pred_fallthru
          _
        // Predicated region
        $region17: #{active_unit_forward.1} parent=11 // pred_check
          %p264 = pneg %p115
        $region18: #{active_unit_forward.1} parent=11 // pred_check_branch
          %266 = sbr.rel (%p264) target = $region20
        $region19: #{active_unit_forward.1} parent=11 // pred_region
          _
        $region20: #{active_unit_forward.1} parent=11 // pred_fallthru
          _
        // Predicated region
        $region21: #{active_unit_forward.1} parent=11 // pred_check
          %p267 = pneg %p136
        $region22: #{active_unit_forward.1} parent=11 // pred_check_branch
          %269 = sbr.rel (%p267) target = $region24
        $region23: #{active_unit_forward.1} parent=11 // pred_region
          _
        $region24: #{active_unit_forward.1} parent=11 // pred_fallthru
          _
        // Predicated region
        $region25: #{active_unit_forward.1} parent=11 // pred_check
          %p270 = pneg %p157
        $region26: #{active_unit_forward.1} parent=11 // pred_check_branch
          %272 = sbr.rel (%p270) target = $region28
        $region27: #{active_unit_forward.1} parent=11 // pred_region
          _
        $region28: #{active_unit_forward.1} parent=11 // pred_fallthru
          _
        // Predicated region
        $region29: #{active_unit_forward.1} parent=11 // pred_check
          %p273 = pneg %p178
        $region30: #{active_unit_forward.1} parent=11 // pred_check_branch
          %275 = sbr.rel (%p273) target = $region32
        $region31: #{active_unit_forward.1} parent=11 // pred_region
          _
        $region32: #{active_unit_forward.1} parent=11 // pred_fallthru
          _
        // Predicated region
        $region33: #{active_unit_forward.1} parent=11 // pred_check
          %p276 = pneg %p199
        $region34: #{active_unit_forward.1} parent=11 // pred_check_branch
          %278 = sbr.rel (%p276) target = $region36
        $region35: #{active_unit_forward.1} parent=11 // pred_region
          _
        $region36: #{active_unit_forward.1} parent=11 // pred_fallthru
          _
        // Predicated region
        $region37: #{active_unit_forward.1} parent=11 // pred_check
          %p279 = pneg %p220
        $region38: #{active_unit_forward.1} parent=11 // pred_check_branch
          %281 = sbr.rel (%p279) target = $region40
        $region39: #{active_unit_forward.1} parent=11 // pred_region
          %s283 = ssub.s32 16, 16
          %284 = vsyncadd [#allocation5], %s283
          %s286 = sshll.u32 %s8, 4
          %s287 = int_to_ptr.vmem [resolvable:$true] %s286
          %289 = dma.vmem_to_smem %s287, 16, [#allocation3], [#allocation5]
        $region40: #{active_unit_forward.1} parent=11 // pred_fallthru
          _
      $region12: #{active_unit_forward.1} parent=5 // pred_fallthru
        _
      %p290 = scmp.lt.s32.totalorder %s21, 2
      // Predicated region
      $region41: #{active_unit_forward.1} parent=5 // pred_check
        %p291 = pneg %p290
      $region42: #{active_unit_forward.1} parent=5 // pred_check_branch
        %293 = sbr.rel (%p291) target = $region44
      $region43: #{active_unit_forward.1} parent=5 // pred_region
        // Predicated region
        $region45: #{active_unit_forward.1} parent=43 // pred_check
          %p294 = pneg %p41
        $region46: #{active_unit_forward.1} parent=43 // pred_check_branch
          %296 = sbr.rel (%p294) target = $region48
        $region47: #{active_unit_forward.1} parent=43 // pred_region
          %s297 = smul.u32 16, %s21
          %p298 = scmp.lt.s32.totalorder %s297, 31
          %s299 = scalar_select %p298, %s297, 31
          %s300 = smul.addr %s299, 8
          %s301 = scalar_lea.vmem %s0, %s300
          %s302 = smul.u32 16, %s21
        $region48: #{active_unit_forward.1} parent=43 // pred_fallthru
          _
        // Predicated region
        $region49: #{active_unit_forward.1} parent=43 // pred_check
          %p303 = pneg %p67
        $region50: #{active_unit_forward.1} parent=43 // pred_check_branch
          %305 = sbr.rel (%p303) target = $region52
        $region51: #{active_unit_forward.1} parent=43 // pred_region
          %s306 = smul.u32 16, %s21
          %p307 = scmp.lt.s32.totalorder %s306, 31
          %s308 = scalar_select %p307, %s306, 31
          %s309 = smul.addr %s308, 8
          %s310 = scalar_lea.vmem %s1, %s309
          %s311 = smul.u32 16, %s21
        $region52: #{active_unit_forward.1} parent=43 // pred_fallthru
          _
      $region44: #{active_unit_forward.1} parent=5 // pred_fallthru
        _
      %p312 = scmp.le.s32.totalorder 1, %s21
      %p313 = scmp.lt.s32.totalorder %s21, 3
      %p314 = pnand %p312, %p313
      %p315 = pneg %p314
      // Predicated region
      $region53: #{active_unit_forward.1} parent=5 // pred_check
        _
      $region54: #{active_unit_forward.1} parent=5 // pred_check_branch
        %317 = sbr.rel (%p314) target = $region56
      $region55: #{active_unit_forward.1} parent=5 // pred_region
        %s318 = ssub.s32 %s21, 1
        // Predicated region
        $region57: #{active_unit_forward.1} parent=55 // pred_check
          %p319 = pneg %p220
        $region58: #{active_unit_forward.1} parent=55 // pred_check_branch
          %321 = sbr.rel (%p319) target = $region60
        $region59: #{active_unit_forward.1} parent=55 // pred_region
          %322 = dma.done [#allocation5], 16
        $region60: #{active_unit_forward.1} parent=55 // pred_fallthru
          _
        %323 = sfence
        %s324 = smul.u32 16, %s26
        %p325 = scmp.lt.s32.totalorder %s324, 31
        %s326 = scalar_select %p325, %s324, 31
        %s327 = smul.addr %s326, 8
        %s328 = scalar_lea.vmem %s0, %s327
        %p329 = pneg %p47
        %p330 = pneg %p44
        %s331 = smul.u32 16, %s26
        %p332 = scmp.lt.s32.totalorder %s331, 31
        %s333 = scalar_select %p332, %s331, 31
        %s334 = smul.addr %s333, 8
        %s335 = scalar_lea.vmem %s1, %s334
        %p336 = pneg %p73
        %p337 = pneg %p70
        %p338 = pneg %p94
        %p339 = pneg %p91
        %p340 = pneg %p115
        %p341 = pneg %p112
        %p342 = pneg %p136
        %p343 = pneg %p133
        %p344 = pneg %p157
        %p345 = pneg %p154
        %p346 = pneg %p178
        %p347 = pneg %p175
        %p348 = pneg %p199
        %p349 = pneg %p196
        %p350 = pneg %p220
        %p351 = pneg %p217
        %p352 = pneg %p246
        %p353 = pneg %p243
        %s354 = sand.u32 %s233, 1
        %s355 = scalar_lea.sflag [#allocation4], %s354
        %s356 = sand.u32 %s233, 1
        %s357 = scalar_lea.vmem [#allocation6], %s356
        %s358 = smul.u32 16, %s26
        %p359 = scmp.lt.s32.totalorder %s358, 31
        %s360 = scalar_select %p359, %s358, 31
        %s361 = smul.addr %s360, 8
        %s362 = scalar_lea.vmem %s0, %s361
        %s363 = smul.u32 16, %s26
        %s364 = smul.u32 16, %s26
        %p365 = scmp.lt.s32.totalorder %s364, 31
        %s366 = scalar_select %p365, %s364, 31
        %s367 = smul.addr %s366, 8
        %s368 = scalar_lea.vmem %s1, %s367
        %s369 = smul.u32 16, %s26
        %v370 = vld [vmem:[%s362] sm:$0xff]
        %v371 = vld [vmem:[%s362 + $0x8] sm:$0xff]
        %v372 = vld [vmem:[%s362 + $0x10] sm:$0xff]
        %v373 = vld [vmem:[%s362 + $0x18] sm:$0xff]
        %v374 = vld [vmem:[%s362 + $0x20] sm:$0xff]
        %v375 = vld [vmem:[%s362 + $0x28] sm:$0xff]
        %v376 = vld [vmem:[%s362 + $0x30] sm:$0xff]
        %v377 = vld [vmem:[%s362 + $0x38] sm:$0xff]
        %v378 = vld [vmem:[%s362 + $0x40] sm:$0xff]
        %v379 = vld [vmem:[%s362 + $0x48] sm:$0xff]
        %v380 = vld [vmem:[%s362 + $0x50] sm:$0xff]
        %v381 = vld [vmem:[%s362 + $0x58] sm:$0xff]
        %v382 = vld [vmem:[%s362 + $0x60] sm:$0xff]
        %v383 = vld [vmem:[%s362 + $0x68] sm:$0xff]
        %v384 = vld [vmem:[%s362 + $0x70] sm:$0xff]
        %v385 = vld [vmem:[%s362 + $0x78] sm:$0xff]
        %v386 = vld [vmem:[%s368] sm:$0xff]
        %v387 = vld [vmem:[%s368 + $0x8] sm:$0xff]
        %v388 = vld [vmem:[%s368 + $0x10] sm:$0xff]
        %v389 = vld [vmem:[%s368 + $0x18] sm:$0xff]
        %v390 = vld [vmem:[%s368 + $0x20] sm:$0xff]
        %v391 = vld [vmem:[%s368 + $0x28] sm:$0xff]
        %v392 = vld [vmem:[%s368 + $0x30] sm:$0xff]
        %v393 = vld [vmem:[%s368 + $0x38] sm:$0xff]
        %v394 = vld [vmem:[%s368 + $0x40] sm:$0xff]
        %v395 = vld [vmem:[%s368 + $0x48] sm:$0xff]
        %v396 = vld [vmem:[%s368 + $0x50] sm:$0xff]
        %v397 = vld [vmem:[%s368 + $0x58] sm:$0xff]
        %v398 = vld [vmem:[%s368 + $0x60] sm:$0xff]
        %v399 = vld [vmem:[%s368 + $0x68] sm:$0xff]
        %v400 = vld [vmem:[%s368 + $0x70] sm:$0xff]
        %v401 = vld [vmem:[%s368 + $0x78] sm:$0xff]
        %v402 = vmul.f32 %v370, %v386
        %v403 = vmul.f32 %v371, %v387
        %v404 = vmul.f32 %v372, %v388
        %v405 = vmul.f32 %v373, %v389
        %v406 = vmul.f32 %v374, %v390
        %v407 = vmul.f32 %v375, %v391
        %v408 = vmul.f32 %v376, %v392
        %v409 = vmul.f32 %v377, %v393
        %v410 = vmul.f32 %v378, %v394
        %v411 = vmul.f32 %v379, %v395
        %v412 = vmul.f32 %v380, %v396
        %v413 = vmul.f32 %v381, %v397
        %v414 = vmul.f32 %v382, %v398
        %v415 = vmul.f32 %v383, %v399
        %v416 = vmul.f32 %v384, %v400
        %v417 = vmul.f32 %v385, %v401
        %v418 = vld [vmem:[%s2] sm:$0xff]
        %v419 = vld [vmem:[%s2 + $0x8] sm:$0xff]
        %v420 = vld [vmem:[%s2 + $0x10] sm:$0xff]
        %v421 = vld [vmem:[%s2 + $0x18] sm:$0xff]
        %v422 = vld [vmem:[%s2 + $0x20] sm:$0xf]
        %v423 = vld [vmem:[%s3] sm:$0xff]
        %v424 = vld [vmem:[%s3 + $0x8] sm:$0xff]
        %v425 = vld [vmem:[%s3 + $0x10] sm:$0xff]
        %v426 = vld [vmem:[%s3 + $0x18] sm:$0xff]
        %v427 = vld [vmem:[%s3 + $0x20] sm:$0xf]
        %vm428 = vcmask 130048
        %v430 = vsel %vm428, %v423, 0
        %v433 = vsel %vm428, %v424, 0
        %v436 = vsel %vm428, %v425, 0
        %v439 = vsel %vm428, %v426, 0
        %v442 = vsel %vm428, %v427, 0
        %v445 = vsel %vm428, %v402, 0
        %v448 = vsel %vm428, %v403, 0
        %v451 = vsel %vm428, %v404, 0
        %v454 = vsel %vm428, %v405, 0
        %v457 = vsel %vm428, %v406, 0
        %v460 = vsel %vm428, %v407, 0
        %v463 = vsel %vm428, %v408, 0
        %v466 = vsel %vm428, %v409, 0
        %v469 = vsel %vm428, %v410, 0
        %v472 = vsel %vm428, %v411, 0
        %v475 = vsel %vm428, %v412, 0
        %v478 = vsel %vm428, %v413, 0
        %v481 = vsel %vm428, %v414, 0
        %v484 = vsel %vm428, %v415, 0
        %v487 = vsel %vm428, %v416, 0
        %v490 = vsel %vm428, %v417, 0
        %492 = vmatprep.subr.mxu0 0.0
        %493 = vmatpush1.xpose.msra.mxu0 %v445
        %494 = vmatprep.subr.mxu0 0.0
        %495 = vmatpush1.xpose.msra.mxu0 %v448
        %496 = vmatprep.subr.mxu0 0.0
        %497 = vmatpush1.xpose.msra.mxu0 %v451
        %498 = vmatprep.subr.mxu0 0.0
        %499 = vmatpush1.xpose.msra.mxu0 %v454
        %500 = vmatprep.subr.mxu0 0.0
        %501 = vmatpush1.xpose.msra.mxu0 %v457
        %502 = vmatprep.subr.mxu0 0.0
        %503 = vmatpush1.xpose.msra.mxu0 %v460
        %504 = vmatprep.subr.mxu0 0.0
        %505 = vmatpush1.xpose.msra.mxu0 %v463
        %506 = vmatprep.subr.mxu0 0.0
        %507 = vmatpush1.xpose.msra.mxu0 %v466
        %508 = vmatprep.subr.mxu0 0.0
        %509 = vmatpush1.xpose.msra.mxu0 %v469
        %510 = vmatprep.subr.mxu0 0.0
        %511 = vmatpush1.xpose.msra.mxu0 %v472
        %512 = vmatprep.subr.mxu0 0.0
        %513 = vmatpush1.xpose.msra.mxu0 %v475
        %514 = vmatprep.subr.mxu0 0.0
        %515 = vmatpush1.xpose.msra.mxu0 %v478
        %516 = vmatprep.subr.mxu0 0.0
        %517 = vmatpush1.xpose.msra.mxu0 %v481
        %518 = vmatprep.subr.mxu0 0.0
        %519 = vmatpush1.xpose.msra.mxu0 %v484
        %520 = vmatprep.subr.mxu0 0.0
        %521 = vmatpush1.xpose.msra.mxu0 %v487
        %522 = vmatprep.subr.mxu0 0.0
        %523 = vmatpush1.xpose.msra.mxu0 %v490
        %524 = vmatprep.subr.mxu0 0.0
        %525 = vmatpush1.xpose.msra.mxu0 0.0
        %526 = vmatprep.subr.mxu0 0.0
        %527 = vmatpush1.xpose.msra.mxu0 0.0
        %528 = vmatprep.subr.mxu0 0.0
        %529 = vmatpush1.xpose.msra.mxu0 0.0
        %530 = vmatprep.subr.mxu0 0.0
        %531 = vmatpush1.xpose.msra.mxu0 0.0
        %532 = vmatprep.subr.mxu0 0.0
        %533 = vmatpush1.xpose.msra.mxu0 0.0
        %534 = vmatprep.subr.mxu0 0.0
        %535 = vmatpush1.xpose.msra.mxu0 0.0
        %536 = vmatprep.subr.mxu0 0.0
        %537 = vmatpush1.xpose.msra.mxu0 0.0
        %538 = vmatprep.subr.mxu0 0.0
        %539 = vmatpush1.xpose.msra.mxu0 0.0
        %540 = vmatprep.subr.mxu0 0.0
        %541 = vmatpush1.xpose.msra.mxu0 0.0
        %542 = vmatprep.subr.mxu0 0.0
        %543 = vmatpush1.xpose.msra.mxu0 0.0
        %544 = vmatprep.subr.mxu0 0.0
        %545 = vmatpush1.xpose.msra.mxu0 0.0
        %546 = vmatprep.subr.mxu0 0.0
        %547 = vmatpush1.xpose.msra.mxu0 0.0
        %548 = vmatprep.subr.mxu0 0.0
        %549 = vmatpush1.xpose.msra.mxu0 0.0
        %550 = vmatprep.subr.mxu0 0.0
        %551 = vmatpush1.xpose.msra.mxu0 0.0
        %552 = vmatprep.subr.mxu0 0.0
        %553 = vmatpush1.xpose.msra.mxu0 0.0
        %554 = vmatprep.subr.mxu0 0.0
        %555 = vmatpush1.xpose.msra.mxu0 0.0
        %556 = vmatprep.mubr.f32.mxu0 0.0
        %557 = vmatmul.mubr.f32.gmra.mrb[0].mxu0 %v430
        %v558 = vpop.f32.mrb[0].mxu0
        %v559 = vadd.f32 0.0, %v558
        %v560 = vpop.f32.mrb[0].mxu0
        %561 = vmatprep.mubr.f32.mxu0 0.0
        %562 = vmatmul.mubr.f32.gmra.mrb[0].mxu0 %v433
        %v563 = vpop.f32.mrb[0].mxu0
        %v564 = vadd.f32 0.0, %v563
        %v565 = vpop.f32.mrb[0].mxu0
        %566 = vmatprep.mubr.f32.mxu0 0.0
        %567 = vmatmul.mubr.f32.gmra.mrb[0].mxu0 %v436
        %v568 = vpop.f32.mrb[0].mxu0
        %v569 = vadd.f32 0.0, %v568
        %v570 = vpop.f32.mrb[0].mxu0
        %571 = vmatprep.mubr.f32.mxu0 0.0
        %572 = vmatmul.mubr.f32.gmra.mrb[0].mxu0 %v439
        %v573 = vpop.f32.mrb[0].mxu0
        %v574 = vadd.f32 0.0, %v573
        %v575 = vpop.f32.mrb[0].mxu0
        %576 = vmatprep.mubr.f32.mxu0 0.0
        %577 = vmatmul.mubr.f32.gmra.mrb[0].mxu0 %v442
        %v578 = vpop.f32.mrb[0].mxu0
        %v579 = vadd.f32 0.0, %v578
        %v580 = vpop.f32.mrb[0].mxu0
        %581 = vdwg.mxu0
        %v583 = vsel %vm428, %v418, 0
        %v586 = vsel %vm428, %v419, 0
        %v589 = vsel %vm428, %v420, 0
        %v592 = vsel %vm428, %v421, 0
        %v595 = vsel %vm428, %v422, 0
        %v598 = vsel %vm428, %v370, 0
        %v601 = vsel %vm428, %v371, 0
        %v604 = vsel %vm428, %v372, 0
        %v607 = vsel %vm428, %v373, 0
        %v610 = vsel %vm428, %v374, 0
        %v613 = vsel %vm428, %v375, 0
        %v616 = vsel %vm428, %v376, 0
        %v619 = vsel %vm428, %v377, 0
        %v622 = vsel %vm428, %v378, 0
        %v625 = vsel %vm428, %v379, 0
        %v628 = vsel %vm428, %v380, 0
        %v631 = vsel %vm428, %v381, 0
        %v634 = vsel %vm428, %v382, 0
        %v637 = vsel %vm428, %v383, 0
        %v640 = vsel %vm428, %v384, 0
        %v643 = vsel %vm428, %v385, 0
        %645 = vmatprep.subr.mxu0 0.0
        %646 = vmatpush1.xpose.msra.mxu0 %v598
        %647 = vmatprep.subr.mxu0 0.0
        %648 = vmatpush1.xpose.msra.mxu0 %v601
        %649 = vmatprep.subr.mxu0 0.0
        %650 = vmatpush1.xpose.msra.mxu0 %v604
        %651 = vmatprep.subr.mxu0 0.0
        %652 = vmatpush1.xpose.msra.mxu0 %v607
        %653 = vmatprep.subr.mxu0 0.0
        %654 = vmatpush1.xpose.msra.mxu0 %v610
        %655 = vmatprep.subr.mxu0 0.0
        %656 = vmatpush1.xpose.msra.mxu0 %v613
        %657 = vmatprep.subr.mxu0 0.0
        %658 = vmatpush1.xpose.msra.mxu0 %v616
        %659 = vmatprep.subr.mxu0 0.0
        %660 = vmatpush1.xpose.msra.mxu0 %v619
        %661 = vmatprep.subr.mxu0 0.0
        %662 = vmatpush1.xpose.msra.mxu0 %v622
        %663 = vmatprep.subr.mxu0 0.0
        %664 = vmatpush1.xpose.msra.mxu0 %v625
        %665 = vmatprep.subr.mxu0 0.0
        %666 = vmatpush1.xpose.msra.mxu0 %v628
        %667 = vmatprep.subr.mxu0 0.0
        %668 = vmatpush1.xpose.msra.mxu0 %v631
        %669 = vmatprep.subr.mxu0 0.0
        %670 = vmatpush1.xpose.msra.mxu0 %v634
        %671 = vmatprep.subr.mxu0 0.0
        %672 = vmatpush1.xpose.msra.mxu0 %v637
        %673 = vmatprep.subr.mxu0 0.0
        %674 = vmatpush1.xpose.msra.mxu0 %v640
        %675 = vmatprep.subr.mxu0 0.0
        %676 = vmatpush1.xpose.msra.mxu0 %v643
        %677 = vmatprep.subr.mxu0 0.0
        %678 = vmatpush1.xpose.msra.mxu0 0.0
        %679 = vmatprep.subr.mxu0 0.0
        %680 = vmatpush1.xpose.msra.mxu0 0.0
        %681 = vmatprep.subr.mxu0 0.0
        %682 = vmatpush1.xpose.msra.mxu0 0.0
        %683 = vmatprep.subr.mxu0 0.0
        %684 = vmatpush1.xpose.msra.mxu0 0.0
        %685 = vmatprep.subr.mxu0 0.0
        %686 = vmatpush1.xpose.msra.mxu0 0.0
        %687 = vmatprep.subr.mxu0 0.0
        %688 = vmatpush1.xpose.msra.mxu0 0.0
        %689 = vmatprep.subr.mxu0 0.0
        %690 = vmatpush1.xpose.msra.mxu0 0.0
        %691 = vmatprep.subr.mxu0 0.0
        %692 = vmatpush1.xpose.msra.mxu0 0.0
        %693 = vmatprep.subr.mxu0 0.0
        %694 = vmatpush1.xpose.msra.mxu0 0.0
        %695 = vmatprep.subr.mxu0 0.0
        %696 = vmatpush1.xpose.msra.mxu0 0.0
        %697 = vmatprep.subr.mxu0 0.0
        %698 = vmatpush1.xpose.msra.mxu0 0.0
        %699 = vmatprep.subr.mxu0 0.0
        %700 = vmatpush1.xpose.msra.mxu0 0.0
        %701 = vmatprep.subr.mxu0 0.0
        %702 = vmatpush1.xpose.msra.mxu0 0.0
        %703 = vmatprep.subr.mxu0 0.0
        %704 = vmatpush1.xpose.msra.mxu0 0.0
        %705 = vmatprep.subr.mxu0 0.0
        %706 = vmatpush1.xpose.msra.mxu0 0.0
        %707 = vmatprep.subr.mxu0 0.0
        %708 = vmatpush1.xpose.msra.mxu0 0.0
        %709 = vmatprep.mubr.f32.mxu0 0.0
        %710 = vmatmul.mubr.f32.gmra.mrb[0].mxu0 %v583
        %v711 = vpop.f32.mrb[0].mxu0
        %v712 = vadd.f32 %v559, %v711
        %v713 = vpop.f32.mrb[0].mxu0
        %714 = vmatprep.mubr.f32.mxu0 0.0
        %715 = vmatmul.mubr.f32.gmra.mrb[0].mxu0 %v586
        %v716 = vpop.f32.mrb[0].mxu0
        %v717 = vadd.f32 %v564, %v716
        %v718 = vpop.f32.mrb[0].mxu0
        %719 = vmatprep.mubr.f32.mxu0 0.0
        %720 = vmatmul.mubr.f32.gmra.mrb[0].mxu0 %v589
        %v721 = vpop.f32.mrb[0].mxu0
        %v722 = vadd.f32 %v569, %v721
        %v723 = vpop.f32.mrb[0].mxu0
        %724 = vmatprep.mubr.f32.mxu0 0.0
        %725 = vmatmul.mubr.f32.gmra.mrb[0].mxu0 %v592
        %v726 = vpop.f32.mrb[0].mxu0
        %v727 = vadd.f32 %v574, %v726
        %v728 = vpop.f32.mrb[0].mxu0
        %729 = vmatprep.mubr.f32.mxu0 0.0
        %730 = vmatmul.mubr.f32.gmra.mrb[0].mxu0 %v595
        %v731 = vpop.f32.mrb[0].mxu0
        %v732 = vadd.f32 %v579, %v731
        %v733 = vpop.f32.mrb[0].mxu0
        %734 = vdwg.mxu0
        %v735 = vld [vmem:[%s4] sm:$0xff]
        %v736 = vld [vmem:[%s4 + $0x8] sm:$0xff]
        %v737 = vld [vmem:[%s4 + $0x10] sm:$0xff]
        %v738 = vld [vmem:[%s4 + $0x18] sm:$0xff]
        %v739 = vld [vmem:[%s4 + $0x20] sm:$0xf]
        %v741 = vsel %vm428, %v735, 0
        %v744 = vsel %vm428, %v736, 0
        %v747 = vsel %vm428, %v737, 0
        %v750 = vsel %vm428, %v738, 0
        %v753 = vsel %vm428, %v739, 0
        %v756 = vsel %vm428, %v386, 0
        %v759 = vsel %vm428, %v387, 0
        %v762 = vsel %vm428, %v388, 0
        %v765 = vsel %vm428, %v389, 0
        %v768 = vsel %vm428, %v390, 0
        %v771 = vsel %vm428, %v391, 0
        %v774 = vsel %vm428, %v392, 0
        %v777 = vsel %vm428, %v393, 0
        %v780 = vsel %vm428, %v394, 0
        %v783 = vsel %vm428, %v395, 0
        %v786 = vsel %vm428, %v396, 0
        %v789 = vsel %vm428, %v397, 0
        %v792 = vsel %vm428, %v398, 0
        %v795 = vsel %vm428, %v399, 0
        %v798 = vsel %vm428, %v400, 0
        %v801 = vsel %vm428, %v401, 0
        %803 = vmatprep.subr.mxu0 0.0
        %804 = vmatpush1.xpose.msra.mxu0 %v756
        %805 = vmatprep.subr.mxu0 0.0
        %806 = vmatpush1.xpose.msra.mxu0 %v759
        %807 = vmatprep.subr.mxu0 0.0
        %808 = vmatpush1.xpose.msra.mxu0 %v762
        %809 = vmatprep.subr.mxu0 0.0
        %810 = vmatpush1.xpose.msra.mxu0 %v765
        %811 = vmatprep.subr.mxu0 0.0
        %812 = vmatpush1.xpose.msra.mxu0 %v768
        %813 = vmatprep.subr.mxu0 0.0
        %814 = vmatpush1.xpose.msra.mxu0 %v771
        %815 = vmatprep.subr.mxu0 0.0
        %816 = vmatpush1.xpose.msra.mxu0 %v774
        %817 = vmatprep.subr.mxu0 0.0
        %818 = vmatpush1.xpose.msra.mxu0 %v777
        %819 = vmatprep.subr.mxu0 0.0
        %820 = vmatpush1.xpose.msra.mxu0 %v780
        %821 = vmatprep.subr.mxu0 0.0
        %822 = vmatpush1.xpose.msra.mxu0 %v783
        %823 = vmatprep.subr.mxu0 0.0
        %824 = vmatpush1.xpose.msra.mxu0 %v786
        %825 = vmatprep.subr.mxu0 0.0
        %826 = vmatpush1.xpose.msra.mxu0 %v789
        %827 = vmatprep.subr.mxu0 0.0
        %828 = vmatpush1.xpose.msra.mxu0 %v792
        %829 = vmatprep.subr.mxu0 0.0
        %830 = vmatpush1.xpose.msra.mxu0 %v795
        %831 = vmatprep.subr.mxu0 0.0
        %832 = vmatpush1.xpose.msra.mxu0 %v798
        %833 = vmatprep.subr.mxu0 0.0
        %834 = vmatpush1.xpose.msra.mxu0 %v801
        %835 = vmatprep.subr.mxu0 0.0
        %836 = vmatpush1.xpose.msra.mxu0 0.0
        %837 = vmatprep.subr.mxu0 0.0
        %838 = vmatpush1.xpose.msra.mxu0 0.0
        %839 = vmatprep.subr.mxu0 0.0
        %840 = vmatpush1.xpose.msra.mxu0 0.0
        %841 = vmatprep.subr.mxu0 0.0
        %842 = vmatpush1.xpose.msra.mxu0 0.0
        %843 = vmatprep.subr.mxu0 0.0
        %844 = vmatpush1.xpose.msra.mxu0 0.0
        %845 = vmatprep.subr.mxu0 0.0
        %846 = vmatpush1.xpose.msra.mxu0 0.0
        %847 = vmatprep.subr.mxu0 0.0
        %848 = vmatpush1.xpose.msra.mxu0 0.0
        %849 = vmatprep.subr.mxu0 0.0
        %850 = vmatpush1.xpose.msra.mxu0 0.0
        %851 = vmatprep.subr.mxu0 0.0
        %852 = vmatpush1.xpose.msra.mxu0 0.0
        %853 = vmatprep.subr.mxu0 0.0
        %854 = vmatpush1.xpose.msra.mxu0 0.0
        %855 = vmatprep.subr.mxu0 0.0
        %856 = vmatpush1.xpose.msra.mxu0 0.0
        %857 = vmatprep.subr.mxu0 0.0
        %858 = vmatpush1.xpose.msra.mxu0 0.0
        %859 = vmatprep.subr.mxu0 0.0
        %860 = vmatpush1.xpose.msra.mxu0 0.0
        %861 = vmatprep.subr.mxu0 0.0
        %862 = vmatpush1.xpose.msra.mxu0 0.0
        %863 = vmatprep.subr.mxu0 0.0
        %864 = vmatpush1.xpose.msra.mxu0 0.0
        %865 = vmatprep.subr.mxu0 0.0
        %866 = vmatpush1.xpose.msra.mxu0 0.0
        %867 = vmatprep.mubr.f32.mxu0 0.0
        %868 = vmatmul.mubr.f32.gmra.mrb[0].mxu0 %v741
        %v869 = vpop.f32.mrb[0].mxu0
        %v870 = vadd.f32 0.0, %v869
        %v871 = vpop.f32.mrb[0].mxu0
        %872 = vmatprep.mubr.f32.mxu0 0.0
        %873 = vmatmul.mubr.f32.gmra.mrb[0].mxu0 %v744
        %v874 = vpop.f32.mrb[0].mxu0
        %v875 = vadd.f32 0.0, %v874
        %v876 = vpop.f32.mrb[0].mxu0
        %877 = vmatprep.mubr.f32.mxu0 0.0
        %878 = vmatmul.mubr.f32.gmra.mrb[0].mxu0 %v747
        %v879 = vpop.f32.mrb[0].mxu0
        %v880 = vadd.f32 0.0, %v879
        %v881 = vpop.f32.mrb[0].mxu0
        %882 = vmatprep.mubr.f32.mxu0 0.0
        %883 = vmatmul.mubr.f32.gmra.mrb[0].mxu0 %v750
        %v884 = vpop.f32.mrb[0].mxu0
        %v885 = vadd.f32 0.0, %v884
        %v886 = vpop.f32.mrb[0].mxu0
        %887 = vmatprep.mubr.f32.mxu0 0.0
        %888 = vmatmul.mubr.f32.gmra.mrb[0].mxu0 %v753
        %v889 = vpop.f32.mrb[0].mxu0
        %v890 = vadd.f32 0.0, %v889
        %v891 = vpop.f32.mrb[0].mxu0
        %892 = vdwg.mxu0
        %v893 = vadd.f32 %v712, %v870
        %v894 = vadd.f32 %v717, %v875
        %v895 = vadd.f32 %v722, %v880
        %v896 = vadd.f32 %v727, %v885
        %v897 = vadd.f32 %v732, %v890
        %v898 = vld [vmem:[%s5] sm:$0xff]
        %v899 = vld [vmem:[%s5 + $0x8] sm:$0xff]
        %v900 = vld [vmem:[%s5 + $0x10] sm:$0xff]
        %v901 = vld [vmem:[%s5 + $0x18] sm:$0xff]
        %v902 = vld [vmem:[%s5 + $0x20] sm:$0xf]
        %904 = vset.pattern.permute.xlu0 0
        %905 = vperm.xlu0 %904, %v898
        %v906 = vpop.permute.xlu0 %905
        %909 = vset.pattern.permute.xlu0 0
        %910 = vperm.xlu0 %909, %v899
        %v911 = vpop.permute.xlu0 %910
        %914 = vset.pattern.permute.xlu0 0
        %915 = vperm.xlu0 %914, %v900
        %v916 = vpop.permute.xlu0 %915
        %919 = vset.pattern.permute.xlu0 0
        %920 = vperm.xlu0 %919, %v901
        %v921 = vpop.permute.xlu0 %920
        %924 = vset.pattern.permute.xlu0 0
        %925 = vperm.xlu0 %924, %v902
        %v926 = vpop.permute.xlu0 %925
        %v928 = vadd.f32 %v893, %v906
        %v929 = vadd.f32 %v894, %v911
        %v930 = vadd.f32 %v895, %v916
        %v931 = vadd.f32 %v896, %v921
        %v932 = vadd.f32 %v897, %v926
        %s933 = sld [smem:[#allocation3]]
        %vm934 = vcmp.gt.f32.partialorder %v928, 0.0
        %vm935 = vcmp.gt.f32.partialorder %v929, 0.0
        %vm936 = vcmp.gt.f32.partialorder %v930, 0.0
        %vm937 = vcmp.gt.f32.partialorder %v931, 0.0
        %vm938 = vcmp.gt.f32.partialorder %v932, 0.0
        %v939 = vstv %s933
        %v940 = vmul.f32 %v939, %v928
        %v941 = vmul.f32 %v939, %v929
        %v942 = vmul.f32 %v939, %v930
        %v943 = vmul.f32 %v939, %v931
        %v944 = vmul.f32 %v939, %v932
        %v945 = vsel %vm934, %v928, %v940
        %v946 = vsel %vm935, %v929, %v941
        %v947 = vsel %vm936, %v930, %v942
        %v948 = vsel %vm937, %v931, %v943
        %v949 = vsel %vm938, %v932, %v944
        %v950 = vld [vmem:[%s6] sm:$0x1]
        %v951 = vld [vmem:[#allocation2] sm:$0x1]
        %953 = vset.pattern.permute.xlu0 0
        %954 = vperm.xlu0 %953, %v951
        %v955 = vpop.permute.xlu0 %954
        %v957 = vlaneseq
        %v958 = vshrl.u32 %v957, 7
        %v959 = vsub.s32 0, %v958
        %v960 = vrot.slane %v955, %v959
        %vm961 = vcmask 293888
        %v963 = vsel %vm961, %v950, 0
        %vm965 = vcmask 1043456
        %v967 = vsel %vm965, %v949, 0
        %969 = vmatprep.subr.mxu0 0.0
        %970 = vmatpush1.msra.mxu0 %v945
        %971 = vmatprep.subr.mxu0 0.0
        %972 = vmatpush1.msra.mxu0 %v946
        %973 = vmatprep.subr.mxu0 0.0
        %974 = vmatpush1.msra.mxu0 %v947
        %975 = vmatprep.subr.mxu0 0.0
        %976 = vmatpush1.msra.mxu0 %v948
        %977 = vmatprep.subr.mxu0 0.0
        %978 = vmatpush1.msra.mxu0 %v967
        %979 = vmatprep.subr.mxu0 0.0
        %980 = vmatpush1.msra.mxu0 0.0
        %981 = vmatprep.subr.mxu0 0.0
        %982 = vmatpush1.msra.mxu0 0.0
        %983 = vmatprep.subr.mxu0 0.0
        %984 = vmatpush1.msra.mxu0 0.0
        %985 = vmatprep.subr.mxu0 0.0
        %986 = vmatpush1.msra.mxu0 0.0
        %987 = vmatprep.subr.mxu0 0.0
        %988 = vmatpush1.msra.mxu0 0.0
        %989 = vmatprep.subr.mxu0 0.0
        %990 = vmatpush1.msra.mxu0 0.0
        %991 = vmatprep.subr.mxu0 0.0
        %992 = vmatpush1.msra.mxu0 0.0
        %993 = vmatprep.subr.mxu0 0.0
        %994 = vmatpush1.msra.mxu0 0.0
        %995 = vmatprep.subr.mxu0 0.0
        %996 = vmatpush1.msra.mxu0 0.0
        %997 = vmatprep.subr.mxu0 0.0
        %998 = vmatpush1.msra.mxu0 0.0
        %999 = vmatprep.subr.mxu0 0.0
        %1000 = vmatpush1.msra.mxu0 0.0
        %1001 = vmatprep.subr.mxu0 0.0
        %1002 = vmatpush1.msra.mxu0 0.0
        %1003 = vmatprep.subr.mxu0 0.0
        %1004 = vmatpush1.msra.mxu0 0.0
        %1005 = vmatprep.subr.mxu0 0.0
        %1006 = vmatpush1.msra.mxu0 0.0
        %1007 = vmatprep.subr.mxu0 0.0
        %1008 = vmatpush1.msra.mxu0 0.0
        %1009 = vmatprep.subr.mxu0 0.0
        %1010 = vmatpush1.msra.mxu0 0.0
        %1011 = vmatprep.subr.mxu0 0.0
        %1012 = vmatpush1.msra.mxu0 0.0
        %1013 = vmatprep.subr.mxu0 0.0
        %1014 = vmatpush1.msra.mxu0 0.0
        %1015 = vmatprep.subr.mxu0 0.0
        %1016 = vmatpush1.msra.mxu0 0.0
        %1017 = vmatprep.subr.mxu0 0.0
        %1018 = vmatpush1.msra.mxu0 0.0
        %1019 = vmatprep.subr.mxu0 0.0
        %1020 = vmatpush1.msra.mxu0 0.0
        %1021 = vmatprep.subr.mxu0 0.0
        %1022 = vmatpush1.msra.mxu0 0.0
        %1023 = vmatprep.subr.mxu0 0.0
        %1024 = vmatpush1.msra.mxu0 0.0
        %1025 = vmatprep.subr.mxu0 0.0
        %1026 = vmatpush1.msra.mxu0 0.0
        %1027 = vmatprep.subr.mxu0 0.0
        %1028 = vmatpush1.msra.mxu0 0.0
        %1029 = vmatprep.subr.mxu0 0.0
        %1030 = vmatpush1.msra.mxu0 0.0
        %1031 = vmatprep.subr.mxu0 0.0
        %1032 = vmatpush1.msra.mxu0 0.0
        %1033 = vmatprep.mubr.f32.mxu0 0.0
        %1034 = vmatmul.mubr.f32.gmra.mrb[0].mxu0 %v963
        %v1035 = vpop.f32.mrb[0].mxu0
        %v1036 = vadd.f32 %v960, %v1035
        %v1037 = vpop.f32.mrb[0].mxu0
        %1038 = vdwg.mxu0
        %s1039 = sld [smem:[#allocation3 + $0x1]]
        %vm1040 = vcmp.gt.f32.partialorder %v1036, 0.0
        %v1041 = vstv %s1039
        %v1042 = vmul.f32 %v1041, %v1036
        %v1043 = vsel %vm1040, %v1036, %v1042
        %1044 = vst [vmem:[%s357] sm:$0x1] %v1043
        %s1045 = sand.u32 %s233, 1
        %s1046 = scalar_lea.sflag [#allocation4], %s1045
        %s1047 = sand.u32 %s233, 1
        %s1048 = scalar_lea.vmem [#allocation6], %s1047
        // Predicated region
        $region61: #{active_unit_forward.1} parent=55 // pred_check
          %p1049 = pneg %p243
        $region62: #{active_unit_forward.1} parent=55 // pred_check_branch
          %1051 = sbr.rel (%p1049) target = $region64
        $region63: #{active_unit_forward.1} parent=55 // pred_region
          %s1053 = ssub.s32 16, 16
          %1054 = vsyncadd %s1046, %s1053
          %s1055 = smul.addr %s26, 16
          %s1056 = scalar_lea.hbm %s9, %s1055
          %s1058 = sshll.u32 %s1048, 4
          %s1059 = int_to_ptr.vmem [resolvable:$true] %s1058
          %1061 = dma.vmem_to_hbm [thread:$0]  %s1059, 16, %s1056, %s1046
        $region64: #{active_unit_forward.1} parent=55 // pred_fallthru
          _
      $region56: #{active_unit_forward.1} parent=5 // pred_fallthru
        _
      %p1062 = scmp.le.s32.totalorder 2, %s21
      // Predicated region
      $region65: #{active_unit_forward.1} parent=5 // pred_check
        %p1063 = pneg %p1062
      $region66: #{active_unit_forward.1} parent=5 // pred_check_branch
        %1065 = sbr.rel (%p1063) target = $region68
      $region67: #{active_unit_forward.1} parent=5 // pred_region
        %s1066 = ssub.s32 %s21, 2
        // Predicated region
        $region69: #{active_unit_forward.1} parent=67 // pred_check
          %p1067 = pneg %p249
        $region70: #{active_unit_forward.1} parent=67 // pred_check_branch
          %1069 = sbr.rel (%p1067) target = $region72
        $region71: #{active_unit_forward.1} parent=67 // pred_region
          %s1070 = sand.u32 %s234, 1
          %s1071 = scalar_lea.sflag [#allocation4], %s1070
          %s1072 = sand.u32 %s234, 1
          %s1073 = scalar_lea.vmem [#allocation6], %s1072
          %1074 = dma.done %s1071, 16
        $region72: #{active_unit_forward.1} parent=67 // pred_fallthru
          _
      $region68: #{active_unit_forward.1} parent=5 // pred_fallthru
        _
    $region6: #{active_unit_forward.1} parent=1 // loop_footer
      %s25 = sadd.s32 1, %s21
    $region7: #{active_unit_forward.1} parent=1 // loop_footer_branch
      %20 = sbr.rel target = $region3
    $region8: #{active_unit_forward.1} parent=1 // loop_exit
      _
    %1075 = vsyncpa [#allocation4], 1
    %s1076 = scalar_lea.sflag [#allocation4], 1
    %1077 = vsyncpa %s1076, 1
    %1078 = vsyncpa [#allocation5], 1
    %s1079 = scalar_lea.sflag [#allocation5], 1
    %1080 = vsyncpa %s1079, 1

</llo_original>
